<compile_context>
chip_gen: v6e
topology: v6e:2x2x1
jax: 0.10.0
libtpu: 0.0.40
codegen_flags: <defaults>
</compile_context>

<pallas_src>
import functools

import jax
import jax.numpy as jnp
from jax.experimental import pallas as pl
from jax.experimental.pallas import tpu as pltpu

_SMEM = pl.BlockSpec(memory_space=pltpu.MemorySpace.SMEM)


# ---------------------------------------------------------------------------
# 1) Module forward (API parity): single RHS evaluation, fully scalar / SMEM.
# ---------------------------------------------------------------------------
def sird_rhs_kernel(params_ref, y_ref, dy_ref):
    """params_ref: SMEM f32[4] = [beta, gamma, mu, t] (t unused, autonomous).
    y_ref: SMEM f32[4] = [S, I, R, D].  dy_ref: SMEM f32[4]."""
    beta = params_ref[0]
    gamma = params_ref[1]
    mu = params_ref[2]

    S = y_ref[0]
    I = y_ref[1]
    R = y_ref[2]

    N = S + I + R
    inv_N = 1.0 / N                 # single divide, reused
    f = beta * S * I * inv_N        # new-infection flux = -dSdt
    dR = gamma * I
    dD = mu * I
    dI = f - dR - dD

    dy_ref[0] = -f
    dy_ref[1] = dI
    dy_ref[2] = dR
    dy_ref[3] = dD


def ode_sird_forward(t, y, beta, gamma, mu):
    """JAX/Pallas equivalent of ODESIRDModel(beta, gamma, mu).forward(t, y).

    Launch-bound on its own; prefer ode_sird_euler / ode_sird_euler_batched
    when the caller is an ODE stepper."""
    params = jnp.asarray([beta, gamma, mu, t], dtype=jnp.float32)
    y = jnp.asarray(y, dtype=jnp.float32).reshape(4)
    return pl.pallas_call(
        sird_rhs_kernel,
        out_shape=jax.ShapeDtypeStruct((4,), jnp.float32),
        in_specs=[_SMEM, _SMEM],
        out_specs=_SMEM,
    )(params, y)


# ---------------------------------------------------------------------------
# 2) Fused explicit-Euler integrator (single trajectory, scalar unit).
# ---------------------------------------------------------------------------
def sird_euler_kernel(beta, gamma, mu, dt, n_steps, y0_ref, y_ref):
    """n_steps Euler steps in one kernel. Params are compile-time constants."""
    beta_dt = dt * beta
    g_dt = dt * gamma
    m_dt = dt * mu
    gm_dt = dt * (gamma + mu)

    S0 = y0_ref[0]
    I0 = y0_ref[1]
    R0 = y0_ref[2]
    D0 = y0_ref[3]

    N0 = S0 + I0 + R0
    inv_N0 = 1.0 / N0               # the only divide in the whole kernel

    def step(_, state):
        S, I, R, inv_N, N, I_sum = state
        f = beta_dt * S * I * inv_N            # dt * beta * S * I / N
        S_new = S - f
        I_new = I + (f - gm_dt * I)
        R_new = R + g_dt * I
        # N only shrinks by the deaths this step: dS + dI + dR = -dD.
        N_new = N - m_dt * I
        # One Newton-Raphson refinement keeps inv_N at f32 accuracy
        # (relative change of N per step is O(dt*mu) << 1).
        inv_new = inv_N * (2.0 - N_new * inv_N)
        return (S_new, I_new, R_new, inv_new, N_new, I_sum + I)

    S, I, R, _, _, I_sum = jax.lax.fori_loop(
        0, n_steps, step,
        (S0, I0, R0, inv_N0, N0, jnp.float32(0.0)),
        unroll=True)

    y_ref[0] = S
    y_ref[1] = I
    y_ref[2] = R
    y_ref[3] = D0 + m_dt * I_sum    # D never feeds back into the dynamics


def ode_sird_euler(y0, beta, gamma, mu, dt, n_steps):
    """Integrate one SIRD trajectory for n_steps Euler steps in ONE kernel."""
    y0 = jnp.asarray(y0, dtype=jnp.float32).reshape(4)
    kernel = functools.partial(
        sird_euler_kernel, float(beta), float(gamma), float(mu), float(dt),
        int(n_steps))
    return pl.pallas_call(
        kernel,
        out_shape=jax.ShapeDtypeStruct((4,), jnp.float32),
        in_specs=[_SMEM],
        out_specs=_SMEM,
    )(y0)


# ---------------------------------------------------------------------------
# 3) Lane-vectorized batched integrator: B trajectories along lanes (VPU/EUP).
# ---------------------------------------------------------------------------
def sird_euler_batched_kernel(beta, gamma, mu, dt, n_steps, y0_ref, y_ref):
    """y0_ref/y_ref: VMEM f32[4, TILE_B]; rows are S, I, R, D."""
    beta_dt = dt * beta
    g_dt = dt * gamma
    m_dt = dt * mu
    gm_dt = dt * (gamma + mu)

    y0 = y0_ref[...]                # (4, TILE_B) in vregs
    S0 = y0[0:1, :]
    I0 = y0[1:2, :]
    R0 = y0[2:3, :]
    D0 = y0[3:4, :]

    def step(_, state):
        S, I, R, D = state
        N = S + I + R
        inv_N = pl.reciprocal(N, approx=True)      # EUP slot (free vs VALU)
        inv_N = inv_N * (2.0 - N * inv_N)          # NR refine back to f32
        f = beta_dt * S * I * inv_N
        return (S - f, I + (f - gm_dt * I), R + g_dt * I, D + m_dt * I)

    S, I, R, D = jax.lax.fori_loop(0, n_steps, step, (S0, I0, R0, D0),
                                   unroll=True)

    y_ref[0:1, :] = S
    y_ref[1:2, :] = I
    y_ref[2:3, :] = R
    y_ref[3:4, :] = D


def ode_sird_euler_batched(y0, beta, gamma, mu, dt, n_steps, tile_b=128):
    """y0: f32[4, B] with B a multiple of tile_b (128 lanes per vreg)."""
    y0 = jnp.asarray(y0, dtype=jnp.float32)
    _, B = y0.shape
    assert B % tile_b == 0
    kernel = functools.partial(
        sird_euler_batched_kernel, float(beta), float(gamma), float(mu),
        float(dt), int(n_steps))
    return pl.pallas_call(
        kernel,
        out_shape=jax.ShapeDtypeStruct((4, B), jnp.float32),
        grid=(B // tile_b,),
        in_specs=[pl.BlockSpec((4, tile_b), lambda b: (0, b))],
        out_specs=pl.BlockSpec((4, tile_b), lambda b: (0, b)),
        compiler_params=pltpu.CompilerParams(
            dimension_semantics=("parallel",)),   # shards across v7x's 2 TCs
    )(y0)


# --- pure-JAX references (mirror the PyTorch forward exactly) ---------------
def ode_sird_reference(t, y, beta, gamma, mu):
    del t
    S, I, R, D = y[0], y[1], y[2], y[3]
    N = S + I + R
    dSdt = -beta * S * I / N
    dRdt = gamma * I
    dDdt = mu * I
    dIdt = -dSdt - dRdt - dDdt
    return jnp.stack([dSdt, dIdt, dRdt, dDdt]).astype(jnp.float32)


def euler_reference(y0, beta, gamma, mu, dt, n_steps):
    def body(_, y):
        return y + dt * ode_sird_reference(0.0, y, beta, gamma, mu)
    return jax.lax.fori_loop(0, n_steps, body, jnp.asarray(y0, jnp.float32))


if __name__ == "__main__":
    key = jax.random.PRNGKey(0)
    y = jax.random.uniform(key, (4,), dtype=jnp.float32, minval=1.0, maxval=100.0)
    t = 0.0
    beta, gamma, mu = 0.3, 0.1, 0.01

    # 1) Single RHS evaluation -- the module's forward pass (API parity).
    dy = jax.block_until_ready(ode_sird_forward(t, y, beta, gamma, mu))
    dy_ref = ode_sird_reference(t, y, beta, gamma, mu)
    assert dy.shape == (4,) and dy.dtype == jnp.float32
    assert jnp.allclose(dy, dy_ref, rtol=1e-5, atol=1e-5), (dy, dy_ref)

    # 2) Fused, unrolled, strength-reduced Euler integrator (one kernel call).
    n_steps, dt = 64, 0.05
    y_end = jax.block_until_ready(ode_sird_euler(y, beta, gamma, mu, dt, n_steps))
    y_end_ref = euler_reference(y, beta, gamma, mu, dt, n_steps)
    assert jnp.allclose(y_end, y_end_ref, rtol=1e-4, atol=1e-4), (y_end, y_end_ref)

    # 3) Lane-vectorized batched integrator: 256 trajectories, 2 grid tiles.
    B = 256
    y0_b = jax.random.uniform(jax.random.PRNGKey(1), (4, B), dtype=jnp.float32,
                              minval=1.0, maxval=100.0)
    y_b = jax.block_until_ready(
        ode_sird_euler_batched(y0_b, beta, gamma, mu, dt, n_steps))
    y_b_ref = jax.vmap(
        lambda y0: euler_reference(y0, beta, gamma, mu, dt, n_steps),
        in_axes=1, out_axes=1)(y0_b)
    assert y_b.shape == (4, B)
    assert jnp.allclose(y_b, y_b_ref, rtol=2e-4, atol=2e-4), (y_b, y_b_ref)

    print("KERNEL_OK")
</pallas_src>

<mosaic_0001>
module attributes {stable_mosaic.version = 11 : i64} {
  func.func @sird_rhs_kernel(%arg0: memref<4xf32, #tpu.memory_space<smem>>, %arg1: memref<4xf32, #tpu.memory_space<smem>>, %arg2: memref<4xf32, #tpu.memory_space<smem>>) attributes {dimension_semantics = [], scalar_prefetch = 0 : i64, scratch_operands = 0 : i64, tpu.core_type = #tpu.core_type<tc>} {
    %c0 = arith.constant 0 : index
    %0 = memref.load %arg0[%c0] : memref<4xf32, #tpu.memory_space<smem>>
    %c1 = arith.constant 1 : index
    %1 = memref.load %arg0[%c1] : memref<4xf32, #tpu.memory_space<smem>>
    %c2 = arith.constant 2 : index
    %2 = memref.load %arg0[%c2] : memref<4xf32, #tpu.memory_space<smem>>
    %c0_0 = arith.constant 0 : index
    %3 = memref.load %arg1[%c0_0] : memref<4xf32, #tpu.memory_space<smem>>
    %c1_1 = arith.constant 1 : index
    %4 = memref.load %arg1[%c1_1] : memref<4xf32, #tpu.memory_space<smem>>
    %c2_2 = arith.constant 2 : index
    %5 = memref.load %arg1[%c2_2] : memref<4xf32, #tpu.memory_space<smem>>
    %6 = arith.addf %3, %4 : f32
    %7 = arith.addf %6, %5 : f32
    %cst = arith.constant 1.000000e+00 : f32
    %8 = arith.divf %cst, %7 : f32
    %9 = arith.mulf %0, %3 : f32
    %10 = arith.mulf %9, %4 : f32
    %11 = arith.mulf %10, %8 : f32
    %12 = arith.mulf %1, %4 : f32
    %13 = arith.mulf %2, %4 : f32
    %14 = arith.subf %11, %12 : f32
    %15 = arith.subf %14, %13 : f32
    %cst_3 = arith.constant 0.000000e+00 : f32
    %16 = arith.subf %cst_3, %11 : f32
    %c0_4 = arith.constant 0 : index
    %17 = memref.load %arg2[%c0_4] : memref<4xf32, #tpu.memory_space<smem>>
    memref.store %16, %arg2[%c0_4] : memref<4xf32, #tpu.memory_space<smem>>
    %c1_5 = arith.constant 1 : index
    %18 = memref.load %arg2[%c1_5] : memref<4xf32, #tpu.memory_space<smem>>
    memref.store %15, %arg2[%c1_5] : memref<4xf32, #tpu.memory_space<smem>>
    %c2_6 = arith.constant 2 : index
    %19 = memref.load %arg2[%c2_6] : memref<4xf32, #tpu.memory_space<smem>>
    memref.store %12, %arg2[%c2_6] : memref<4xf32, #tpu.memory_space<smem>>
    %c3 = arith.constant 3 : index
    %20 = memref.load %arg2[%c3] : memref<4xf32, #tpu.memory_space<smem>>
    memref.store %13, %arg2[%c3] : memref<4xf32, #tpu.memory_space<smem>>
    return
  }
}

</mosaic_0001>

<llo_original>
// kernel: tpu_custom_call.1
$region0: #{tpu_custom_call.1}
  #allocation0 [shape = 'u32[]', space=smem, size = 0x4, offset = 0x4, fixed_abs, tag = 'smem constant byte address 0x4 - core index']
  #allocation1 [shape = 'u32[144,128]{1,0:T(1,128)}', space=vmem, size = 0x12000, scoped, tag = 'internal scratch']
  %s0 = inlined_call_operand.hbm [shape: f32[4], index: 0, kind: input, shape index: {}]
  %s1 = inlined_call_operand.vmem [shape: f32[4], index: 1, kind: input, shape index: {}]
  %s2 = inlined_call_operand.hbm [shape: f32[4], index: 2, kind: output, shape index: {}]
  %s3 = sld [smem:[#allocation0]]
  $region26: #{tpu_custom_call.1} parent=0
    _
  %s5 = ssub.s32 1, %s3
  %s6 = scalar_select 0, %s5, %s3
  $region1: #{tpu_custom_call.1} parent=0
    #allocation2 [shape = 'u8[512]{0}', space=smem, size = 0x200, scoped, tag = 'input window, operand 0, single buffered']
    #allocation3 [shape = 's32[1]{0}', space=sflag, size = 0x4, scoped, tag = 'scoped memory for tpu_custom_call.1']
    #allocation4 [shape = 's32[1]{0}', space=sflag, size = 0x4, scoped, tag = 'scoped memory for tpu_custom_call.1']
    #allocation5 [shape = 's32[1]{0}', space=sflag, size = 0x4, scoped, tag = 'scoped memory for tpu_custom_call.1']
    #allocation6 [shape = 'u8[512]{0}', space=smem, size = 0x200, scoped, tag = 'input window, operand 1, single buffered']
    #allocation7 [shape = 'u8[512]{0}', space=smem, size = 0x200, scoped, tag = 'output window, operand 0, single buffered']
    %7 = vsyncpa [#allocation3], 0
    %8 = vsyncpa [#allocation5], 0
    %9 = vsyncpa [#allocation4], 0
    // Predicated region
    $region2: #{tpu_custom_call.1} parent=1 // pred_check
      _
    $region3: #{tpu_custom_call.1} parent=1 // pred_check_branch
      %11 = sbr.rel (0) target = $region5
    $region4: #{tpu_custom_call.1} parent=1 // pred_region
      %s13 = ssub.s32 16, 16
      %14 = vsyncadd [#allocation3], %s13
      %17 = dma.hbm_to_smem %s0, 16, [#allocation2], [#allocation3]
    $region5: #{tpu_custom_call.1} parent=1 // pred_fallthru
      _
    // Predicated region
    $region6: #{tpu_custom_call.1} parent=1 // pred_check
      _
    $region7: #{tpu_custom_call.1} parent=1 // pred_check_branch
      %19 = sbr.rel (0) target = $region9
    $region8: #{tpu_custom_call.1} parent=1 // pred_region
      %s21 = ssub.s32 16, 16
      %22 = vsyncadd [#allocation5], %s21
      %s24 = sshll.u32 %s1, 4
      %s25 = int_to_ptr.vmem [resolvable:$true] %s24
      %27 = dma.vmem_to_smem %s25, 16, [#allocation6], [#allocation5]
    $region9: #{tpu_custom_call.1} parent=1 // pred_fallthru
      _
    // Predicated region
    $region10: #{tpu_custom_call.1} parent=1 // pred_check
      _
    $region11: #{tpu_custom_call.1} parent=1 // pred_check_branch
      %29 = sbr.rel (0) target = $region13
    $region12: #{tpu_custom_call.1} parent=1 // pred_region
      %30 = dma.done [#allocation3], 16
    $region13: #{tpu_custom_call.1} parent=1 // pred_fallthru
      _
    // Predicated region
    $region14: #{tpu_custom_call.1} parent=1 // pred_check
      _
    $region15: #{tpu_custom_call.1} parent=1 // pred_check_branch
      %32 = sbr.rel (0) target = $region17
    $region16: #{tpu_custom_call.1} parent=1 // pred_region
      %33 = dma.done [#allocation5], 16
    $region17: #{tpu_custom_call.1} parent=1 // pred_fallthru
      _
    %34 = sfence
    %s35 = sld [smem:[#allocation2]]
    %s36 = sld [smem:[#allocation2 + $0x1]]
    %s37 = sld [smem:[#allocation2 + $0x2]]
    %s38 = sld [smem:[#allocation6]]
    %s39 = sld [smem:[#allocation6 + $0x1]]
    %s40 = sld [smem:[#allocation6 + $0x2]]
    %s41 = sadd.f32 %s38, %s39
    %s42 = sadd.f32 %s41, %s40
    %v43 = vstv %s42
    %v44 = vrcp.pop %v43
    %s45 = vtos %v44
    %s46 = smul.f32 %s35, %s38
    %s47 = smul.f32 %s46, %s39
    %s48 = smul.f32 %s47, %s45
    %s49 = smul.f32 %s36, %s39
    %s50 = smul.f32 %s37, %s39
    %s51 = ssub.f32 %s48, %s49
    %s52 = ssub.f32 %s51, %s50
    %s53 = ssub.f32 0.0, %s48
    %s54 = scalar_lea.smem [#allocation7], 0
    %55 = sst [smem:[%s54]] %s53
    %s56 = scalar_lea.smem [#allocation7], 1
    %57 = sst [smem:[%s56]] %s52
    %s58 = scalar_lea.smem [#allocation7], 2
    %59 = sst [smem:[%s58]] %s49
    %s60 = scalar_lea.smem [#allocation7], 3
    %61 = sst [smem:[%s60]] %s50
    // Predicated region
    $region18: #{tpu_custom_call.1} parent=1 // pred_check
      _
    $region19: #{tpu_custom_call.1} parent=1 // pred_check_branch
      %63 = sbr.rel (0) target = $region21
    $region20: #{tpu_custom_call.1} parent=1 // pred_region
      %s65 = ssub.s32 16, 16
      %66 = vsyncadd [#allocation4], %s65
      %69 = dma.smem_to_hbm [#allocation7], 16, %s2, [#allocation4]
    $region21: #{tpu_custom_call.1} parent=1 // pred_fallthru
      _
    // Predicated region
    $region22: #{tpu_custom_call.1} parent=1 // pred_check
      _
    $region23: #{tpu_custom_call.1} parent=1 // pred_check_branch
      %71 = sbr.rel (0) target = $region25
    $region24: #{tpu_custom_call.1} parent=1 // pred_region
      %72 = dma.done [#allocation4], 16
    $region25: #{tpu_custom_call.1} parent=1 // pred_fallthru
      _
    %73 = sfence
    %74 = vsyncpa [#allocation3], 1
    %75 = vsyncpa [#allocation4], 1
    %76 = vsyncpa [#allocation5], 1

</llo_original>
